<compile_context>
chip_gen: v7x
topology: tpu7x:2x2x1
jax: 0.10.0
libtpu: 0.0.40
codegen_flags: <defaults>
</compile_context>

<pallas_src>
import functools

import jax
import jax.numpy as jnp
from jax import lax
from jax.experimental import pallas as pl
from jax.experimental.pallas import tpu as pltpu


def _gpt_fwd_kernel(idx_ref, slab_c_ref, slab_d_ref, out_ref, *,
                    num_layers, dims, offs_c, offs_d):
    """Whole GPT forward in one grid step.

    idx_ref    : (N, 1) int32, N = B*T (batch folded into sublanes)
    slab_c_ref : (Rc, C)  packed slab of all C-wide params (tok, pos, wp, w2)
    slab_d_ref : (Rd, W2) packed slab of wide params (w1, biases, wlm, blm)
    out_ref    : (N, V)   logits, lane-dense (V a multiple of 128)
    """
    N, V, C, H = dims
    f32 = jnp.float32
    wdt = slab_c_ref.dtype                       # matmul-operand dtype (bf16)

    def rows(ref, off, n, width):
        # static, sublane-aligned row/col slice of a packed slab
        return ref[off:off + n, :width]

    # ---- token embedding as a one-hot matmul on the MXU (no gather loop) ---
    vcol = lax.broadcasted_iota(jnp.int32, (N, V), 1)
    onehot = (vcol == idx_ref[...]).astype(f32).astype(wdt)          # (N, V)
    tok = rows(slab_c_ref, offs_c["tok"], V, C)                      # (V, C)
    x = jnp.dot(onehot, tok, preferred_element_type=f32)             # (N, C)

    # ---- position embedding: host-tiled (N, C) slab -> single VPU add ------
    x = x + rows(slab_c_ref, offs_c["pos"], N, C).astype(f32)

    def layer_norm(h):
        # gamma/beta are folded into the following weight matrix (host-side).
        # var = E[h^2] - mu^2 : the two lane reductions are independent.
        mu = jnp.mean(h, axis=-1, keepdims=True)
        ms = jnp.mean(h * h, axis=-1, keepdims=True)
        return (h - mu) * lax.rsqrt(ms - mu * mu + 1e-5)

    # ---- transformer blocks -------------------------------------------------
    # chatbot.py's MultiHeadAttention.forward returns dropout(proj(x_ln)) and
    # discards the concatenated head outputs, so the q/k/v/softmax path does
    # not affect the forward output.  Dropout = identity (eval mode).
    for l in range(num_layers):
        h = layer_norm(x)
        wp = rows(slab_c_ref, offs_c["wp"][l], C, C)
        bp = rows(slab_d_ref, offs_d["bp"][l], 1, C).astype(f32)
        x = x + jnp.dot(h.astype(wdt), wp, preferred_element_type=f32) + bp

        h = layer_norm(x)
        w1 = rows(slab_d_ref, offs_d["w1"][l], C, H)
        b1 = rows(slab_d_ref, offs_d["b1"][l], 1, H).astype(f32)
        ff = jnp.dot(h.astype(wdt), w1, preferred_element_type=f32) + b1
        ff = jnp.maximum(ff, 0.0)                                    # ReLU, f32
        w2 = rows(slab_c_ref, offs_c["w2"][l], H, C)
        b2 = rows(slab_d_ref, offs_d["b2"][l], 1, C).astype(f32)
        x = x + jnp.dot(ff.astype(wdt), w2, preferred_element_type=f32) + b2

    # ---- final LN (folded affine) + LM head ---------------------------------
    h = layer_norm(x)
    wlm = rows(slab_d_ref, offs_d["wlm"], C, V)
    blm = rows(slab_d_ref, offs_d["blm"], 1, V).astype(f32)
    logits = jnp.dot(h.astype(wdt), wlm, preferred_element_type=f32) + blm
    out_ref[...] = logits.astype(out_ref.dtype)


def _pack_rows(blocks, width, dtype):
    """Stack 2-D blocks row-wise into one (rows, width) slab.

    Each block is zero-padded to `width` columns and to a multiple of 8 rows so
    every section starts on a sublane-aligned offset.  Returns (slab, offsets).
    """
    parts, offs, cur = [], [], 0
    for b in blocks:
        b = jnp.asarray(b, dtype)
        if b.ndim == 1:
            b = b[None, :]
        r, c = b.shape
        b = jnp.pad(b, ((0, (-r) % 8), (0, width - c)))
        offs.append(cur)
        parts.append(b)
        cur += b.shape[0]
    return jnp.concatenate(parts, axis=0), offs


def gpt_forward(idx, params, weights_dtype=jnp.bfloat16):
    """idx: (B, T) int32 token ids.  Returns logits of shape (B, T, V)."""
    B, T = idx.shape
    N = B * T
    V, C = params["tok"].shape
    H = 4 * C
    L = params["wp"].shape[0]
    W2 = max(H, V)

    # ---- host-side parameter prep (free at trace time) ----------------------
    # Fold LayerNorm affine into the following matmul:
    #   (norm(x)*g + b) @ W + c  ==  norm(x) @ (diag(g) W) + (b @ W + c)
    wp = params["ln1g"][:, :, None] * params["wp"]                         # (L,C,C)
    bp = jnp.einsum("lc,lcd->ld", params["ln1b"], params["wp"]) + params["bp"]
    w1 = params["ln2g"][:, :, None] * params["w1"]                         # (L,C,H)
    b1 = jnp.einsum("lc,lch->lh", params["ln2b"], params["w1"]) + params["b1"]
    w2, b2 = params["w2"], params["b2"]
    wlm = params["lnfg"][0][:, None] * params["wlm"]                       # (C,V)
    blm = params["lnfb"][0] @ params["wlm"] + params["blm"][0]             # (V,)
    # Pre-tile positions to the folded (B*T, C) layout (row-major B,T flatten):
    pos_slab = jnp.tile(params["pos"], (B, 1))                             # (N,C)

    # ---- pack all parameters into 2 contiguous slabs (2 DMAs, not 17) ------
    c_blocks = [params["tok"], pos_slab]
    for l in range(L):
        c_blocks += [wp[l], w2[l]]
    slab_c, c_offs = _pack_rows(c_blocks, C, weights_dtype)
    offs_c = {"tok": c_offs[0], "pos": c_offs[1],
              "wp": [c_offs[2 + 2 * l] for l in range(L)],
              "w2": [c_offs[3 + 2 * l] for l in range(L)]}

    d_blocks = []
    for l in range(L):
        d_blocks += [w1[l], bp[l], b1[l], b2[l]]
    d_blocks += [wlm, blm]
    slab_d, d_offs = _pack_rows(d_blocks, W2, weights_dtype)
    offs_d = {"w1": [d_offs[4 * l + 0] for l in range(L)],
              "bp": [d_offs[4 * l + 1] for l in range(L)],
              "b1": [d_offs[4 * l + 2] for l in range(L)],
              "b2": [d_offs[4 * l + 3] for l in range(L)],
              "wlm": d_offs[4 * L], "blm": d_offs[4 * L + 1]}

    idx_flat = idx.reshape(N, 1).astype(jnp.int32)

    kernel = functools.partial(_gpt_fwd_kernel, num_layers=L,
                               dims=(N, V, C, H), offs_c=offs_c, offs_d=offs_d)
    logits = pl.pallas_call(
        kernel,
        out_shape=jax.ShapeDtypeStruct((N, V), jnp.float32),
        in_specs=[pl.BlockSpec(memory_space=pltpu.MemorySpace.VMEM)] * 3,
        out_specs=pl.BlockSpec(memory_space=pltpu.MemorySpace.VMEM),
    )(idx_flat, slab_c, slab_d)
    return logits.reshape(B, T, V)


def _reference(idx, p):
    """Pure-JAX f32 reference of the (inference-mode) PyTorch forward."""
    B, T = idx.shape
    x = p["tok"][idx] + p["pos"][jnp.arange(T)]

    def ln(h, g, b):
        mu = jnp.mean(h, axis=-1, keepdims=True)
        var = jnp.mean(jnp.square(h - mu), axis=-1, keepdims=True)
        return (h - mu) / jnp.sqrt(var + 1e-5) * g + b

    L = p["wp"].shape[0]
    for l in range(L):
        h = ln(x, p["ln1g"][l], p["ln1b"][l])
        x = x + h @ p["wp"][l] + p["bp"][l]          # MHA returns proj(ln1(x))
        h = ln(x, p["ln2g"][l], p["ln2b"][l])
        x = x + jnp.maximum(h @ p["w1"][l] + p["b1"][l], 0.0) @ p["w2"][l] + p["b2"][l]
    h = ln(x, p["lnfg"][0], p["lnfb"][0])
    return h @ p["wlm"] + p["blm"][0]


if __name__ == "__main__":
    # config: vocab_size=128 (lane-dense logits), embedding_dim=32,
    # block_size=8, decoder_layers=2, number_of_heads=4 (head weights unused:
    # the module discards the attention output), dropout=0 (inference), batch=2
    B, T, C, L, V = 2, 8, 32, 2, 128
    key = jax.random.PRNGKey(0)
    ks = jax.random.split(key, 16)

    def init(k, shape, scale=0.02):           # PyTorch _init_weights: N(0, 0.02)
        return scale * jax.random.normal(k, shape, dtype=jnp.float32)

    # Non-trivial LN affines / biases so the host-side folding is actually
    # exercised by the self-check.
    params = dict(
        tok=init(ks[0], (V, C)),
        pos=init(ks[1], (T, C)),
        ln1g=1.0 + init(ks[2], (L, C), 0.1),  ln1b=init(ks[3], (L, C)),
        wp=init(ks[4], (L, C, C)),            bp=init(ks[5], (L, C)),
        ln2g=1.0 + init(ks[6], (L, C), 0.1),  ln2b=init(ks[7], (L, C)),
        w1=init(ks[8], (L, C, 4 * C)),        b1=init(ks[9], (L, 4 * C)),
        w2=init(ks[10], (L, 4 * C, C)),       b2=init(ks[11], (L, C)),
        lnfg=1.0 + init(ks[12], (1, C), 0.1), lnfb=init(ks[13], (1, C)),
        wlm=init(ks[14], (C, V)),             blm=init(ks[15], (1, V)),
    )
    idx = jax.random.randint(jax.random.PRNGKey(1), (B, T), 0, V, dtype=jnp.int32)

    logits = jax.block_until_ready(gpt_forward(idx, params))

    ref = _reference(idx, params)
    assert logits.shape == (B, T, V)
    max_err = float(jnp.max(jnp.abs(logits - ref)))
    # bf16 weight slabs (MXU inputs only) -> relaxed tolerance vs f32 reference
    assert max_err < 2e-2, max_err
    print("KERNEL_OK")
</pallas_src>

<mosaic_0001>
module attributes {stable_mosaic.version = 11 : i64} {
  func.func @_gpt_fwd_kernel(%arg0: memref<16x1xi32, #tpu.memory_space<vmem>>, %arg1: memref<464x32xbf16, #tpu.memory_space<vmem>>, %arg2: memref<152x128xbf16, #tpu.memory_space<vmem>>, %arg3: memref<16x128xf32, #tpu.memory_space<vmem>>) attributes {dimension_semantics = [], scalar_prefetch = 0 : i64, scratch_operands = 0 : i64, tpu.core_type = #tpu.core_type<tc>} {
    %0 = tpu.iota {dimensions = array<i32: 1>} : vector<16x128xi32>
    %c0 = arith.constant 0 : index
    %c0_0 = arith.constant 0 : index
    %1 = vector.load %arg0[%c0, %c0_0] : memref<16x1xi32, #tpu.memory_space<vmem>>, vector<16x1xi32>
    %2 = vector.broadcast %1 : vector<16x1xi32> to vector<16x128xi32>
    %3 = arith.cmpi eq, %0, %2 : vector<16x128xi32>
    %4 = arith.extui %3 : vector<16x128xi1> to vector<16x128xi32>
    %5 = arith.sitofp %4 : vector<16x128xi32> to vector<16x128xf32>
    %6 = arith.truncf %5 : vector<16x128xf32> to vector<16x128xbf16>
    %c0_1 = arith.constant 0 : index
    %c0_2 = arith.constant 0 : index
    %7 = vector.load %arg1[%c0_1, %c0_2] : memref<464x32xbf16, #tpu.memory_space<vmem>>, vector<128x32xbf16>
    %cst = arith.constant dense<0.000000e+00> : vector<16x32xf32>
    %8 = tpu.matmul %6, %7, %cst {dimension_numbers = #tpu.dot_dimension_numbers<[1], [0], [0], [1], [0, 0, 1, 1], [], []>} : vector<16x128xbf16>, vector<128x32xbf16>, vector<16x32xf32> -> vector<16x32xf32>
    %c128 = arith.constant 128 : index
    %c0_3 = arith.constant 0 : index
    %9 = vector.load %arg1[%c128, %c0_3] : memref<464x32xbf16, #tpu.memory_space<vmem>>, vector<16x32xbf16>
    %10 = arith.extf %9 : vector<16x32xbf16> to vector<16x32xf32>
    %11 = arith.addf %8, %10 : vector<16x32xf32>
    %cst_4 = arith.constant dense<0.000000e+00> : vector<16xf32>
    %12 = vector.multi_reduction <add>, %11, %cst_4 [1] : vector<16x32xf32> to vector<16xf32>
    %13 = vector.shape_cast %12 : vector<16xf32> to vector<16x1xf32>
    %cst_5 = arith.constant 3.200000e+01 : f32
    %14 = vector.broadcast %cst_5 : f32 to vector<16x1xf32>
    %15 = arith.divf %13, %14 : vector<16x1xf32>
    %16 = arith.mulf %11, %11 : vector<16x32xf32>
    %cst_6 = arith.constant dense<0.000000e+00> : vector<16xf32>
    %17 = vector.multi_reduction <add>, %16, %cst_6 [1] : vector<16x32xf32> to vector<16xf32>
    %18 = vector.shape_cast %17 : vector<16xf32> to vector<16x1xf32>
    %cst_7 = arith.constant 3.200000e+01 : f32
    %19 = vector.broadcast %cst_7 : f32 to vector<16x1xf32>
    %20 = arith.divf %18, %19 : vector<16x1xf32>
    %21 = vector.broadcast %15 : vector<16x1xf32> to vector<16x32xf32>
    %22 = arith.subf %11, %21 : vector<16x32xf32>
    %23 = arith.mulf %15, %15 : vector<16x1xf32>
    %24 = arith.subf %20, %23 : vector<16x1xf32>
    %cst_8 = arith.constant 9.99999974E-6 : f32
    %25 = vector.broadcast %cst_8 : f32 to vector<16x1xf32>
    %26 = arith.addf %24, %25 : vector<16x1xf32>
    %27 = math.rsqrt %26 : vector<16x1xf32>
    %28 = vector.broadcast %27 : vector<16x1xf32> to vector<16x32xf32>
    %29 = arith.mulf %22, %28 : vector<16x32xf32>
    %c144 = arith.constant 144 : index
    %c0_9 = arith.constant 0 : index
    %30 = vector.load %arg1[%c144, %c0_9] : memref<464x32xbf16, #tpu.memory_space<vmem>>, vector<32x32xbf16>
    %c32 = arith.constant 32 : index
    %c0_10 = arith.constant 0 : index
    %31 = vector.load %arg2[%c32, %c0_10] : memref<152x128xbf16, #tpu.memory_space<vmem>>, vector<1x32xbf16>
    %32 = arith.extf %31 : vector<1x32xbf16> to vector<1x32xf32>
    %33 = arith.truncf %29 : vector<16x32xf32> to vector<16x32xbf16>
    %cst_11 = arith.constant dense<0.000000e+00> : vector<16x32xf32>
    %34 = tpu.matmul %33, %30, %cst_11 {dimension_numbers = #tpu.dot_dimension_numbers<[1], [0], [0], [1], [0, 0, 1, 1], [], []>} : vector<16x32xbf16>, vector<32x32xbf16>, vector<16x32xf32> -> vector<16x32xf32>
    %35 = arith.addf %11, %34 : vector<16x32xf32>
    %36 = vector.broadcast %32 : vector<1x32xf32> to vector<16x32xf32>
    %37 = arith.addf %35, %36 : vector<16x32xf32>
    %cst_12 = arith.constant dense<0.000000e+00> : vector<16xf32>
    %38 = vector.multi_reduction <add>, %37, %cst_12 [1] : vector<16x32xf32> to vector<16xf32>
    %39 = vector.shape_cast %38 : vector<16xf32> to vector<16x1xf32>
    %cst_13 = arith.constant 3.200000e+01 : f32
    %40 = vector.broadcast %cst_13 : f32 to vector<16x1xf32>
    %41 = arith.divf %39, %40 : vector<16x1xf32>
    %42 = arith.mulf %37, %37 : vector<16x32xf32>
    %cst_14 = arith.constant dense<0.000000e+00> : vector<16xf32>
    %43 = vector.multi_reduction <add>, %42, %cst_14 [1] : vector<16x32xf32> to vector<16xf32>
    %44 = vector.shape_cast %43 : vector<16xf32> to vector<16x1xf32>
    %cst_15 = arith.constant 3.200000e+01 : f32
    %45 = vector.broadcast %cst_15 : f32 to vector<16x1xf32>
    %46 = arith.divf %44, %45 : vector<16x1xf32>
    %47 = vector.broadcast %41 : vector<16x1xf32> to vector<16x32xf32>
    %48 = arith.subf %37, %47 : vector<16x32xf32>
    %49 = arith.mulf %41, %41 : vector<16x1xf32>
    %50 = arith.subf %46, %49 : vector<16x1xf32>
    %cst_16 = arith.constant 9.99999974E-6 : f32
    %51 = vector.broadcast %cst_16 : f32 to vector<16x1xf32>
    %52 = arith.addf %50, %51 : vector<16x1xf32>
    %53 = math.rsqrt %52 : vector<16x1xf32>
    %54 = vector.broadcast %53 : vector<16x1xf32> to vector<16x32xf32>
    %55 = arith.mulf %48, %54 : vector<16x32xf32>
    %c0_17 = arith.constant 0 : index
    %c0_18 = arith.constant 0 : index
    %56 = vector.load %arg2[%c0_17, %c0_18] : memref<152x128xbf16, #tpu.memory_space<vmem>>, vector<32x128xbf16>
    %c40 = arith.constant 40 : index
    %c0_19 = arith.constant 0 : index
    %57 = vector.load %arg2[%c40, %c0_19] : memref<152x128xbf16, #tpu.memory_space<vmem>>, vector<1x128xbf16>
    %58 = arith.extf %57 : vector<1x128xbf16> to vector<1x128xf32>
    %59 = arith.truncf %55 : vector<16x32xf32> to vector<16x32xbf16>
    %cst_20 = arith.constant dense<0.000000e+00> : vector<16x128xf32>
    %60 = tpu.matmul %59, %56, %cst_20 {dimension_numbers = #tpu.dot_dimension_numbers<[1], [0], [0], [1], [0, 0, 1, 1], [], []>} : vector<16x32xbf16>, vector<32x128xbf16>, vector<16x128xf32> -> vector<16x128xf32>
    %61 = vector.broadcast %58 : vector<1x128xf32> to vector<16x128xf32>
    %62 = arith.addf %60, %61 : vector<16x128xf32>
    %cst_21 = arith.constant 0.000000e+00 : f32
    %63 = vector.broadcast %cst_21 : f32 to vector<16x128xf32>
    %64 = arith.maximumf %62, %63 : vector<16x128xf32>
    %c176 = arith.constant 176 : index
    %c0_22 = arith.constant 0 : index
    %65 = vector.load %arg1[%c176, %c0_22] : memref<464x32xbf16, #tpu.memory_space<vmem>>, vector<128x32xbf16>
    %c48 = arith.constant 48 : index
    %c0_23 = arith.constant 0 : index
    %66 = vector.load %arg2[%c48, %c0_23] : memref<152x128xbf16, #tpu.memory_space<vmem>>, vector<1x32xbf16>
    %67 = arith.extf %66 : vector<1x32xbf16> to vector<1x32xf32>
    %68 = arith.truncf %64 : vector<16x128xf32> to vector<16x128xbf16>
    %cst_24 = arith.constant dense<0.000000e+00> : vector<16x32xf32>
    %69 = tpu.matmul %68, %65, %cst_24 {dimension_numbers = #tpu.dot_dimension_numbers<[1], [0], [0], [1], [0, 0, 1, 1], [], []>} : vector<16x128xbf16>, vector<128x32xbf16>, vector<16x32xf32> -> vector<16x32xf32>
    %70 = arith.addf %37, %69 : vector<16x32xf32>
    %71 = vector.broadcast %67 : vector<1x32xf32> to vector<16x32xf32>
    %72 = arith.addf %70, %71 : vector<16x32xf32>
    %cst_25 = arith.constant dense<0.000000e+00> : vector<16xf32>
    %73 = vector.multi_reduction <add>, %72, %cst_25 [1] : vector<16x32xf32> to vector<16xf32>
    %74 = vector.shape_cast %73 : vector<16xf32> to vector<16x1xf32>
    %cst_26 = arith.constant 3.200000e+01 : f32
    %75 = vector.broadcast %cst_26 : f32 to vector<16x1xf32>
    %76 = arith.divf %74, %75 : vector<16x1xf32>
    %77 = arith.mulf %72, %72 : vector<16x32xf32>
    %cst_27 = arith.constant dense<0.000000e+00> : vector<16xf32>
    %78 = vector.multi_reduction <add>, %77, %cst_27 [1] : vector<16x32xf32> to vector<16xf32>
    %79 = vector.shape_cast %78 : vector<16xf32> to vector<16x1xf32>
    %cst_28 = arith.constant 3.200000e+01 : f32
    %80 = vector.broadcast %cst_28 : f32 to vector<16x1xf32>
    %81 = arith.divf %79, %80 : vector<16x1xf32>
    %82 = vector.broadcast %76 : vector<16x1xf32> to vector<16x32xf32>
    %83 = arith.subf %72, %82 : vector<16x32xf32>
    %84 = arith.mulf %76, %76 : vector<16x1xf32>
    %85 = arith.subf %81, %84 : vector<16x1xf32>
    %cst_29 = arith.constant 9.99999974E-6 : f32
    %86 = vector.broadcast %cst_29 : f32 to vector<16x1xf32>
    %87 = arith.addf %85, %86 : vector<16x1xf32>
    %88 = math.rsqrt %87 : vector<16x1xf32>
    %89 = vector.broadcast %88 : vector<16x1xf32> to vector<16x32xf32>
    %90 = arith.mulf %83, %89 : vector<16x32xf32>
    %c304 = arith.constant 304 : index
    %c0_30 = arith.constant 0 : index
    %91 = vector.load %arg1[%c304, %c0_30] : memref<464x32xbf16, #tpu.memory_space<vmem>>, vector<32x32xbf16>
    %c88 = arith.constant 88 : index
    %c0_31 = arith.constant 0 : index
    %92 = vector.load %arg2[%c88, %c0_31] : memref<152x128xbf16, #tpu.memory_space<vmem>>, vector<1x32xbf16>
    %93 = arith.extf %92 : vector<1x32xbf16> to vector<1x32xf32>
    %94 = arith.truncf %90 : vector<16x32xf32> to vector<16x32xbf16>
    %cst_32 = arith.constant dense<0.000000e+00> : vector<16x32xf32>
    %95 = tpu.matmul %94, %91, %cst_32 {dimension_numbers = #tpu.dot_dimension_numbers<[1], [0], [0], [1], [0, 0, 1, 1], [], []>} : vector<16x32xbf16>, vector<32x32xbf16>, vector<16x32xf32> -> vector<16x32xf32>
    %96 = arith.addf %72, %95 : vector<16x32xf32>
    %97 = vector.broadcast %93 : vector<1x32xf32> to vector<16x32xf32>
    %98 = arith.addf %96, %97 : vector<16x32xf32>
    %cst_33 = arith.constant dense<0.000000e+00> : vector<16xf32>
    %99 = vector.multi_reduction <add>, %98, %cst_33 [1] : vector<16x32xf32> to vector<16xf32>
    %100 = vector.shape_cast %99 : vector<16xf32> to vector<16x1xf32>
    %cst_34 = arith.constant 3.200000e+01 : f32
    %101 = vector.broadcast %cst_34 : f32 to vector<16x1xf32>
    %102 = arith.divf %100, %101 : vector<16x1xf32>
    %103 = arith.mulf %98, %98 : vector<16x32xf32>
    %cst_35 = arith.constant dense<0.000000e+00> : vector<16xf32>
    %104 = vector.multi_reduction <add>, %103, %cst_35 [1] : vector<16x32xf32> to vector<16xf32>
    %105 = vector.shape_cast %104 : vector<16xf32> to vector<16x1xf32>
    %cst_36 = arith.constant 3.200000e+01 : f32
    %106 = vector.broadcast %cst_36 : f32 to vector<16x1xf32>
    %107 = arith.divf %105, %106 : vector<16x1xf32>
    %108 = vector.broadcast %102 : vector<16x1xf32> to vector<16x32xf32>
    %109 = arith.subf %98, %108 : vector<16x32xf32>
    %110 = arith.mulf %102, %102 : vector<16x1xf32>
    %111 = arith.subf %107, %110 : vector<16x1xf32>
    %cst_37 = arith.constant 9.99999974E-6 : f32
    %112 = vector.broadcast %cst_37 : f32 to vector<16x1xf32>
    %113 = arith.addf %111, %112 : vector<16x1xf32>
    %114 = math.rsqrt %113 : vector<16x1xf32>
    %115 = vector.broadcast %114 : vector<16x1xf32> to vector<16x32xf32>
    %116 = arith.mulf %109, %115 : vector<16x32xf32>
    %c56 = arith.constant 56 : index
    %c0_38 = arith.constant 0 : index
    %117 = vector.load %arg2[%c56, %c0_38] : memref<152x128xbf16, #tpu.memory_space<vmem>>, vector<32x128xbf16>
    %c96 = arith.constant 96 : index
    %c0_39 = arith.constant 0 : index
    %118 = vector.load %arg2[%c96, %c0_39] : memref<152x128xbf16, #tpu.memory_space<vmem>>, vector<1x128xbf16>
    %119 = arith.extf %118 : vector<1x128xbf16> to vector<1x128xf32>
    %120 = arith.truncf %116 : vector<16x32xf32> to vector<16x32xbf16>
    %cst_40 = arith.constant dense<0.000000e+00> : vector<16x128xf32>
    %121 = tpu.matmul %120, %117, %cst_40 {dimension_numbers = #tpu.dot_dimension_numbers<[1], [0], [0], [1], [0, 0, 1, 1], [], []>} : vector<16x32xbf16>, vector<32x128xbf16>, vector<16x128xf32> -> vector<16x128xf32>
    %122 = vector.broadcast %119 : vector<1x128xf32> to vector<16x128xf32>
    %123 = arith.addf %121, %122 : vector<16x128xf32>
    %cst_41 = arith.constant 0.000000e+00 : f32
    %124 = vector.broadcast %cst_41 : f32 to vector<16x128xf32>
    %125 = arith.maximumf %123, %124 : vector<16x128xf32>
    %c336 = arith.constant 336 : index
    %c0_42 = arith.constant 0 : index
    %126 = vector.load %arg1[%c336, %c0_42] : memref<464x32xbf16, #tpu.memory_space<vmem>>, vector<128x32xbf16>
    %c104 = arith.constant 104 : index
    %c0_43 = arith.constant 0 : index
    %127 = vector.load %arg2[%c104, %c0_43] : memref<152x128xbf16, #tpu.memory_space<vmem>>, vector<1x32xbf16>
    %128 = arith.extf %127 : vector<1x32xbf16> to vector<1x32xf32>
    %129 = arith.truncf %125 : vector<16x128xf32> to vector<16x128xbf16>
    %cst_44 = arith.constant dense<0.000000e+00> : vector<16x32xf32>
    %130 = tpu.matmul %129, %126, %cst_44 {dimension_numbers = #tpu.dot_dimension_numbers<[1], [0], [0], [1], [0, 0, 1, 1], [], []>} : vector<16x128xbf16>, vector<128x32xbf16>, vector<16x32xf32> -> vector<16x32xf32>
    %131 = arith.addf %98, %130 : vector<16x32xf32>
    %132 = vector.broadcast %128 : vector<1x32xf32> to vector<16x32xf32>
    %133 = arith.addf %131, %132 : vector<16x32xf32>
    %cst_45 = arith.constant dense<0.000000e+00> : vector<16xf32>
    %134 = vector.multi_reduction <add>, %133, %cst_45 [1] : vector<16x32xf32> to vector<16xf32>
    %135 = vector.shape_cast %134 : vector<16xf32> to vector<16x1xf32>
    %cst_46 = arith.constant 3.200000e+01 : f32
    %136 = vector.broadcast %cst_46 : f32 to vector<16x1xf32>
    %137 = arith.divf %135, %136 : vector<16x1xf32>
    %138 = arith.mulf %133, %133 : vector<16x32xf32>
    %cst_47 = arith.constant dense<0.000000e+00> : vector<16xf32>
    %139 = vector.multi_reduction <add>, %138, %cst_47 [1] : vector<16x32xf32> to vector<16xf32>
    %140 = vector.shape_cast %139 : vector<16xf32> to vector<16x1xf32>
    %cst_48 = arith.constant 3.200000e+01 : f32
    %141 = vector.broadcast %cst_48 : f32 to vector<16x1xf32>
    %142 = arith.divf %140, %141 : vector<16x1xf32>
    %143 = vector.broadcast %137 : vector<16x1xf32> to vector<16x32xf32>
    %144 = arith.subf %133, %143 : vector<16x32xf32>
    %145 = arith.mulf %137, %137 : vector<16x1xf32>
    %146 = arith.subf %142, %145 : vector<16x1xf32>
    %cst_49 = arith.constant 9.99999974E-6 : f32
    %147 = vector.broadcast %cst_49 : f32 to vector<16x1xf32>
    %148 = arith.addf %146, %147 : vector<16x1xf32>
    %149 = math.rsqrt %148 : vector<16x1xf32>
    %150 = vector.broadcast %149 : vector<16x1xf32> to vector<16x32xf32>
    %151 = arith.mulf %144, %150 : vector<16x32xf32>
    %c112 = arith.constant 112 : index
    %c0_50 = arith.constant 0 : index
    %152 = vector.load %arg2[%c112, %c0_50] : memref<152x128xbf16, #tpu.memory_space<vmem>>, vector<32x128xbf16>
    %c144_51 = arith.constant 144 : index
    %c0_52 = arith.constant 0 : index
    %153 = vector.load %arg2[%c144_51, %c0_52] : memref<152x128xbf16, #tpu.memory_space<vmem>>, vector<1x128xbf16>
    %154 = arith.extf %153 : vector<1x128xbf16> to vector<1x128xf32>
    %155 = arith.truncf %151 : vector<16x32xf32> to vector<16x32xbf16>
    %cst_53 = arith.constant dense<0.000000e+00> : vector<16x128xf32>
    %156 = tpu.matmul %155, %152, %cst_53 {dimension_numbers = #tpu.dot_dimension_numbers<[1], [0], [0], [1], [0, 0, 1, 1], [], []>} : vector<16x32xbf16>, vector<32x128xbf16>, vector<16x128xf32> -> vector<16x128xf32>
    %157 = vector.broadcast %154 : vector<1x128xf32> to vector<16x128xf32>
    %158 = arith.addf %156, %157 : vector<16x128xf32>
    %c0_54 = arith.constant 0 : index
    %c0_55 = arith.constant 0 : index
    %159 = vector.load %arg3[%c0_54, %c0_55] : memref<16x128xf32, #tpu.memory_space<vmem>>, vector<16x128xf32>
    tpu.vector_store %arg3[%c0_54, %c0_55], %158 {strides = array<i32>} : memref<16x128xf32, #tpu.memory_space<vmem>>, vector<16x128xf32>,
    return
  }
}

</mosaic_0001>

<llo_original>
// kernel: tpu_custom_call.1
$region0: #{tpu_custom_call.1}
  #allocation0 [shape = 'u32[]', space=smem, size = 0x4, offset = 0x4, fixed_abs, tag = 'smem constant byte address 0x4 - core index']
  #allocation1 [shape = 'u32[144,128]{1,0:T(1,128)}', space=vmem, size = 0x12000, scoped, tag = 'internal scratch']
  %s0 = inlined_call_operand.vmem [shape: s32[16,1], index: 0, kind: input, shape index: {}]
  %s1 = inlined_call_operand.vmem [shape: bf16[464,32], index: 1, kind: input, shape index: {}]
  %s2 = inlined_call_operand.vmem [shape: bf16[152,128], index: 2, kind: input, shape index: {}]
  %s3 = inlined_call_operand.hbm [shape: f32[16,128], index: 3, kind: output, shape index: {}]
  %s4 = sld [smem:[#allocation0]]
  $region22: #{tpu_custom_call.1} parent=0
    _
  %s6 = ssub.s32 1, %s4
  %s7 = scalar_select 0, %s6, %s4
  $region1: #{tpu_custom_call.1} parent=0
    #allocation2 [shape = 'u8[8192]{0}', space=vmem, size = 0x2000, scoped, tag = 'output window, operand 0, single buffered']
    #allocation3 [shape = 's32[1]{0}', space=sflag, size = 0x4, scoped, tag = 'scoped memory for tpu_custom_call.1']
    %8 = vsyncpa [#allocation3], 0
    // Predicated region
    $region2: #{tpu_custom_call.1} parent=1 // pred_check
      _
    $region3: #{tpu_custom_call.1} parent=1 // pred_check_branch
      %10 = sbr.rel (0) target = $region5
    $region4: #{tpu_custom_call.1} parent=1 // pred_region
      _
    $region5: #{tpu_custom_call.1} parent=1 // pred_fallthru
      _
    // Predicated region
    $region6: #{tpu_custom_call.1} parent=1 // pred_check
      _
    $region7: #{tpu_custom_call.1} parent=1 // pred_check_branch
      %12 = sbr.rel (0) target = $region9
    $region8: #{tpu_custom_call.1} parent=1 // pred_region
      _
    $region9: #{tpu_custom_call.1} parent=1 // pred_fallthru
      _
    // Predicated region
    $region10: #{tpu_custom_call.1} parent=1 // pred_check
      _
    $region11: #{tpu_custom_call.1} parent=1 // pred_check_branch
      %14 = sbr.rel (0) target = $region13
    $region12: #{tpu_custom_call.1} parent=1 // pred_region
      _
    $region13: #{tpu_custom_call.1} parent=1 // pred_fallthru
      _
    %v16 = vlaneseq
    %v17 = vand.u32 %v16, 127
    %v18 = vld [vmem:[%s0] sm:$0xff]
    %v19 = vld [vmem:[%s0 + $0x8] sm:$0xff]
    %20 = vset.pattern.permute.xlu0 0
    %21 = vperm.xlu0 %20, %v18
    %v22 = vpop.permute.xlu0 %21
    %23 = vset.pattern.permute.xlu0 0
    %24 = vperm.xlu0 %23, %v19
    %v25 = vpop.permute.xlu0 %24
    %vm26 = vcmp.eq.s32.totalorder %v17, %v22
    %vm27 = vcmp.eq.s32.totalorder %v17, %v25
    %v28 = vsel %vm26, 1, 0
    %v29 = vsel %vm27, 1, 0
    %v30 = vcvt.s32.f32 %v28
    %v31 = vcvt.s32.f32 %v29
    %v32 = vpack.c.bf16 %v31, %v30
    %v33 = vld [vmem:[%s1] sm:$0xf]
    %v34 = vld [vmem:[%s1 + $0x4] sm:$0xf]
    %v35 = vld [vmem:[%s1 + $0x8] sm:$0xf]
    %v36 = vld [vmem:[%s1 + $0xc] sm:$0xf]
    %v37 = vld [vmem:[%s1 + $0x10] sm:$0xf]
    %v38 = vld [vmem:[%s1 + $0x14] sm:$0xf]
    %v39 = vld [vmem:[%s1 + $0x18] sm:$0xf]
    %v40 = vld [vmem:[%s1 + $0x1c] sm:$0xf]
    %v41 = vld [vmem:[%s1 + $0x20] sm:$0xf]
    %v42 = vld [vmem:[%s1 + $0x24] sm:$0xf]
    %v43 = vld [vmem:[%s1 + $0x28] sm:$0xf]
    %v44 = vld [vmem:[%s1 + $0x2c] sm:$0xf]
    %v45 = vld [vmem:[%s1 + $0x30] sm:$0xf]
    %v46 = vld [vmem:[%s1 + $0x34] sm:$0xf]
    %v47 = vld [vmem:[%s1 + $0x38] sm:$0xf]
    %v48 = vld [vmem:[%s1 + $0x3c] sm:$0xf]
    %v49 = vld [vmem:[%s1 + $0x40] sm:$0xf]
    %v50 = vld [vmem:[%s1 + $0x44] sm:$0xf]
    %v51 = vunpack.c.l.bf16 %v49
    %v52 = vunpack.c.l.bf16 %v50
    %v69 = vunpack.c.l.b16 %v33
    %v70 = vunpack.c.l.b16 %v34
    %v71 = vunpack.c.l.b16 %v35
    %v72 = vunpack.c.l.b16 %v36
    %v73 = vunpack.c.l.b16 %v37
    %v74 = vunpack.c.l.b16 %v38
    %v75 = vunpack.c.l.b16 %v39
    %v76 = vunpack.c.l.b16 %v40
    %v77 = vunpack.c.l.b16 %v41
    %v78 = vunpack.c.l.b16 %v42
    %v79 = vunpack.c.l.b16 %v43
    %v80 = vunpack.c.l.b16 %v44
    %v81 = vunpack.c.l.b16 %v45
    %v82 = vunpack.c.l.b16 %v46
    %v83 = vunpack.c.l.b16 %v47
    %v84 = vunpack.c.l.b16 %v48
    %v85 = vpack.c.b16 %v70, %v69
    %v86 = vpack.c.b16 %v72, %v71
    %v87 = vpack.c.b16 %v74, %v73
    %v88 = vpack.c.b16 %v76, %v75
    %v89 = vpack.c.b16 %v78, %v77
    %v90 = vpack.c.b16 %v80, %v79
    %v91 = vpack.c.b16 %v82, %v81
    %v92 = vpack.c.b16 %v84, %v83
    %101 = vmatprep.subr.bf16.mxu0 0
    %102 = vmatpush1.bf16.msra.mxu0 %v85
    %103 = vmatprep.subr.bf16.mxu0 0
    %104 = vmatpush1.bf16.msra.mxu0 %v86
    %105 = vmatprep.subr.bf16.mxu0 0
    %106 = vmatpush1.bf16.msra.mxu0 %v87
    %107 = vmatprep.subr.bf16.mxu0 0
    %108 = vmatpush1.bf16.msra.mxu0 %v88
    %109 = vmatprep.subr.bf16.mxu0 0
    %110 = vmatpush1.bf16.msra.mxu0 %v89
    %111 = vmatprep.subr.bf16.mxu0 0
    %112 = vmatpush1.bf16.msra.mxu0 %v90
    %113 = vmatprep.subr.bf16.mxu0 0
    %114 = vmatpush1.bf16.msra.mxu0 %v91
    %115 = vmatprep.subr.bf16.mxu0 0
    %116 = vmatpush1.bf16.msra.mxu0 %v92
    %117 = vmatprep.subr.bf16.mxu0 0
    %118 = vmatpush1.bf16.msra.mxu0 0
    %119 = vmatprep.subr.bf16.mxu0 0
    %120 = vmatpush1.bf16.msra.mxu0 0
    %121 = vmatprep.subr.bf16.mxu0 0
    %122 = vmatpush1.bf16.msra.mxu0 0
    %123 = vmatprep.subr.bf16.mxu0 0
    %124 = vmatpush1.bf16.msra.mxu0 0
    %125 = vmatprep.subr.bf16.mxu0 0
    %126 = vmatpush1.bf16.msra.mxu0 0
    %127 = vmatprep.subr.bf16.mxu0 0
    %128 = vmatpush1.bf16.msra.mxu0 0
    %129 = vmatprep.subr.bf16.mxu0 0
    %130 = vmatpush1.bf16.msra.mxu0 0
    %131 = vmatprep.subr.bf16.mxu0 0
    %132 = vmatpush1.bf16.msra.mxu0 0
    %133 = vmatprep.mubr.bf16.mxu0 0
    %134 = vmatmul.mubr.bf16.gmra.mrb[0].mxu0 %v32
    %v135 = vpop.f32.mrb[0].mxu0
    %v136 = vadd.f32 %v51, %v135
    %v137 = vpop.f32.mrb[0].mxu0
    %v138 = vpop.f32.mrb[0].mxu0
    %v139 = vadd.f32 %v52, %v138
    %v140 = vpop.f32.mrb[0].mxu0
    %141 = vdwg.mxu0
    %vm142 = vcmask 261120
    %v143 = vsel %vm142, %v136, 0.0
    %144 = vadd.xlane.f32.xlu0 %v143
    %v145 = vpop.xlane.xlu0 %144
    %v146 = vsel %vm142, %v139, 0.0
    %147 = vadd.xlane.f32.xlu0 %v146
    %v148 = vpop.xlane.xlu0 %147
    %v149 = vrcp.pop 32.0
    %v150 = vmul.f32 %v145, %v149
    %v151 = vmul.f32 %v148, %v149
    %v152 = vmul.f32 %v136, %v136
    %v153 = vmul.f32 %v139, %v139
    %v154 = vsel %vm142, %v152, 0.0
    %155 = vadd.xlane.f32.xlu0 %v154
    %v156 = vpop.xlane.xlu0 %155
    %v157 = vsel %vm142, %v153, 0.0
    %158 = vadd.xlane.f32.xlu0 %v157
    %v159 = vpop.xlane.xlu0 %158
    %v160 = vmul.f32 %v156, %v149
    %v161 = vmul.f32 %v159, %v149
    %v162 = vsub.f32 %v136, %v150
    %v163 = vsub.f32 %v139, %v151
    %v164 = vmul.f32 %v150, %v150
    %v165 = vmul.f32 %v151, %v151
    %v166 = vsub.f32 %v160, %v164
    %v167 = vsub.f32 %v161, %v165
    %v168 = vadd.f32 %v166, 1e-05
    %v169 = vadd.f32 %v167, 1e-05
    %v170 = vrsqrt.pop %v168
    %v171 = vrsqrt.pop %v169
    %v172 = vmul.f32 %v162, %v170
    %v173 = vmul.f32 %v163, %v171
    %v174 = vld [vmem:[%s1 + $0x48] sm:$0xf]
    %v175 = vld [vmem:[%s1 + $0x4c] sm:$0xf]
    %v176 = vld [vmem:[%s1 + $0x50] sm:$0xf]
    %v177 = vld [vmem:[%s1 + $0x54] sm:$0xf]
    %v178 = vld [vmem:[%s2 + $0x10] sm:$0x1]
    %v179 = vunpack.c.l.bf16 %v178
    %v180 = vpack.c.bf16 %v173, %v172
    %v185 = vunpack.c.l.b16 %v174
    %v186 = vunpack.c.l.b16 %v175
    %v187 = vunpack.c.l.b16 %v176
    %v188 = vunpack.c.l.b16 %v177
    %v189 = vpack.c.b16 %v186, %v185
    %v190 = vpack.c.b16 %v188, %v187
    %v194 = vsel %vm142, %v180, 0
    %196 = vmatprep.subr.bf16.mxu0 0
    %197 = vmatpush1.bf16.msra.mxu0 %v189
    %198 = vmatprep.subr.bf16.mxu0 0
    %199 = vmatpush1.bf16.msra.mxu0 %v190
    %200 = vmatprep.subr.bf16.mxu0 0
    %201 = vmatpush1.bf16.msra.mxu0 0
    %202 = vmatprep.subr.bf16.mxu0 0
    %203 = vmatpush1.bf16.msra.mxu0 0
    %204 = vmatprep.subr.bf16.mxu0 0
    %205 = vmatpush1.bf16.msra.mxu0 0
    %206 = vmatprep.subr.bf16.mxu0 0
    %207 = vmatpush1.bf16.msra.mxu0 0
    %208 = vmatprep.subr.bf16.mxu0 0
    %209 = vmatpush1.bf16.msra.mxu0 0
    %210 = vmatprep.subr.bf16.mxu0 0
    %211 = vmatpush1.bf16.msra.mxu0 0
    %212 = vmatprep.subr.bf16.mxu0 0
    %213 = vmatpush1.bf16.msra.mxu0 0
    %214 = vmatprep.subr.bf16.mxu0 0
    %215 = vmatpush1.bf16.msra.mxu0 0
    %216 = vmatprep.subr.bf16.mxu0 0
    %217 = vmatpush1.bf16.msra.mxu0 0
    %218 = vmatprep.subr.bf16.mxu0 0
    %219 = vmatpush1.bf16.msra.mxu0 0
    %220 = vmatprep.subr.bf16.mxu0 0
    %221 = vmatpush1.bf16.msra.mxu0 0
    %222 = vmatprep.subr.bf16.mxu0 0
    %223 = vmatpush1.bf16.msra.mxu0 0
    %224 = vmatprep.subr.bf16.mxu0 0
    %225 = vmatpush1.bf16.msra.mxu0 0
    %226 = vmatprep.subr.bf16.mxu0 0
    %227 = vmatpush1.bf16.msra.mxu0 0
    %228 = vmatprep.mubr.bf16.mxu0 0
    %229 = vmatmul.mubr.bf16.gmra.mrb[0].mxu0 %v194
    %v230 = vpop.f32.mrb[0].mxu0
    %v231 = vadd.f32 0.0, %v230
    %v232 = vpop.f32.mrb[0].mxu0
    %v233 = vpop.f32.mrb[0].mxu0
    %v234 = vadd.f32 0.0, %v233
    %v235 = vpop.f32.mrb[0].mxu0
    %236 = vdwg.mxu0
    %v237 = vadd.f32 %v136, %v231
    %v238 = vadd.f32 %v139, %v234
    %v239 = vlaneseq
    %v240 = vshrl.u32 %v239, 7
    %v241 = vsub.s32 0, %v240
    %v242 = vrot.slane %v179, %v241
    %v243 = vadd.f32 %v237, %v242
    %v244 = vadd.f32 %v238, %v242
    %v245 = vsel %vm142, %v243, 0.0
    %246 = vadd.xlane.f32.xlu0 %v245
    %v247 = vpop.xlane.xlu0 %246
    %v248 = vsel %vm142, %v244, 0.0
    %249 = vadd.xlane.f32.xlu0 %v248
    %v250 = vpop.xlane.xlu0 %249
    %v251 = vmul.f32 %v247, %v149
    %v252 = vmul.f32 %v250, %v149
    %v253 = vmul.f32 %v243, %v243
    %v254 = vmul.f32 %v244, %v244
    %v255 = vsel %vm142, %v253, 0.0
    %256 = vadd.xlane.f32.xlu0 %v255
    %v257 = vpop.xlane.xlu0 %256
    %v258 = vsel %vm142, %v254, 0.0
    %259 = vadd.xlane.f32.xlu0 %v258
    %v260 = vpop.xlane.xlu0 %259
    %v261 = vmul.f32 %v257, %v149
    %v262 = vmul.f32 %v260, %v149
    %v263 = vsub.f32 %v243, %v251
    %v264 = vsub.f32 %v244, %v252
    %v265 = vmul.f32 %v251, %v251
    %v266 = vmul.f32 %v252, %v252
    %v267 = vsub.f32 %v261, %v265
    %v268 = vsub.f32 %v262, %v266
    %v269 = vadd.f32 %v267, 1e-05
    %v270 = vadd.f32 %v268, 1e-05
    %v271 = vrsqrt.pop %v269
    %v272 = vrsqrt.pop %v270
    %v273 = vmul.f32 %v263, %v271
    %v274 = vmul.f32 %v264, %v272
    %v275 = vld [vmem:[%s2] sm:$0xf]
    %v276 = vld [vmem:[%s2 + $0x4] sm:$0xf]
    %v277 = vld [vmem:[%s2 + $0x8] sm:$0xf]
    %v278 = vld [vmem:[%s2 + $0xc] sm:$0xf]
    %v279 = vld [vmem:[%s2 + $0x14] sm:$0x1]
    %v280 = vunpack.c.l.bf16 %v279
    %v281 = vpack.c.bf16 %v274, %v273
    %v282 = vlaneseq
    %v283 = vshrl.u32 %v282, 7
    %v284 = vsub.s32 0, %v283
    %v285 = vrot.slane %v280, %v284
    %v290 = vunpack.c.l.b16 %v275
    %v291 = vunpack.c.l.b16 %v276
    %v292 = vunpack.c.l.b16 %v277
    %v293 = vunpack.c.l.b16 %v278
    %v294 = vpack.c.b16 %v291, %v290
    %v295 = vpack.c.b16 %v293, %v292
    %v299 = vsel %vm142, %v281, 0
    %301 = vmatprep.subr.bf16.mxu0 0
    %302 = vmatpush1.bf16.msra.mxu0 %v294
    %303 = vmatprep.subr.bf16.mxu0 0
    %304 = vmatpush1.bf16.msra.mxu0 %v295
    %305 = vmatprep.subr.bf16.mxu0 0
    %306 = vmatpush1.bf16.msra.mxu0 0
    %307 = vmatprep.subr.bf16.mxu0 0
    %308 = vmatpush1.bf16.msra.mxu0 0
    %309 = vmatprep.subr.bf16.mxu0 0
    %310 = vmatpush1.bf16.msra.mxu0 0
    %311 = vmatprep.subr.bf16.mxu0 0
    %312 = vmatpush1.bf16.msra.mxu0 0
    %313 = vmatprep.subr.bf16.mxu0 0
    %314 = vmatpush1.bf16.msra.mxu0 0
    %315 = vmatprep.subr.bf16.mxu0 0
    %316 = vmatpush1.bf16.msra.mxu0 0
    %317 = vmatprep.subr.bf16.mxu0 0
    %318 = vmatpush1.bf16.msra.mxu0 0
    %319 = vmatprep.subr.bf16.mxu0 0
    %320 = vmatpush1.bf16.msra.mxu0 0
    %321 = vmatprep.subr.bf16.mxu0 0
    %322 = vmatpush1.bf16.msra.mxu0 0
    %323 = vmatprep.subr.bf16.mxu0 0
    %324 = vmatpush1.bf16.msra.mxu0 0
    %325 = vmatprep.subr.bf16.mxu0 0
    %326 = vmatpush1.bf16.msra.mxu0 0
    %327 = vmatprep.subr.bf16.mxu0 0
    %328 = vmatpush1.bf16.msra.mxu0 0
    %329 = vmatprep.subr.bf16.mxu0 0
    %330 = vmatpush1.bf16.msra.mxu0 0
    %331 = vmatprep.subr.bf16.mxu0 0
    %332 = vmatpush1.bf16.msra.mxu0 0
    %333 = vmatprep.mubr.bf16.mxu0 0
    %334 = vmatmul.mubr.bf16.gmra.mrb[0].mxu0 %v299
    %v335 = vpop.f32.mrb[0].mxu0
    %v336 = vadd.f32 %v285, %v335
    %v337 = vpop.f32.mrb[0].mxu0
    %v338 = vpop.f32.mrb[0].mxu0
    %v339 = vadd.f32 %v285, %v338
    %v340 = vpop.f32.mrb[0].mxu0
    %341 = vdwg.mxu0
    %v342 = vmax.f32 %v336, 0.0
    %v343 = vmax.f32 %v339, 0.0
    %v344 = vld [vmem:[%s1 + $0x58] sm:$0xf]
    %v345 = vld [vmem:[%s1 + $0x5c] sm:$0xf]
    %v346 = vld [vmem:[%s1 + $0x60] sm:$0xf]
    %v347 = vld [vmem:[%s1 + $0x64] sm:$0xf]
    %v348 = vld [vmem:[%s1 + $0x68] sm:$0xf]
    %v349 = vld [vmem:[%s1 + $0x6c] sm:$0xf]
    %v350 = vld [vmem:[%s1 + $0x70] sm:$0xf]
    %v351 = vld [vmem:[%s1 + $0x74] sm:$0xf]
    %v352 = vld [vmem:[%s1 + $0x78] sm:$0xf]
    %v353 = vld [vmem:[%s1 + $0x7c] sm:$0xf]
    %v354 = vld [vmem:[%s1 + $0x80] sm:$0xf]
    %v355 = vld [vmem:[%s1 + $0x84] sm:$0xf]
    %v356 = vld [vmem:[%s1 + $0x88] sm:$0xf]
    %v357 = vld [vmem:[%s1 + $0x8c] sm:$0xf]
    %v358 = vld [vmem:[%s1 + $0x90] sm:$0xf]
    %v359 = vld [vmem:[%s1 + $0x94] sm:$0xf]
    %v360 = vld [vmem:[%s2 + $0x18] sm:$0x1]
    %v361 = vunpack.c.l.bf16 %v360
    %v362 = vpack.c.bf16 %v343, %v342
    %v379 = vunpack.c.l.b16 %v344
    %v380 = vunpack.c.l.b16 %v345
    %v381 = vunpack.c.l.b16 %v346
    %v382 = vunpack.c.l.b16 %v347
    %v383 = vunpack.c.l.b16 %v348
    %v384 = vunpack.c.l.b16 %v349
    %v385 = vunpack.c.l.b16 %v350
    %v386 = vunpack.c.l.b16 %v351
    %v387 = vunpack.c.l.b16 %v352
    %v388 = vunpack.c.l.b16 %v353
    %v389 = vunpack.c.l.b16 %v354
    %v390 = vunpack.c.l.b16 %v355
    %v391 = vunpack.c.l.b16 %v356
    %v392 = vunpack.c.l.b16 %v357
    %v393 = vunpack.c.l.b16 %v358
    %v394 = vunpack.c.l.b16 %v359
    %v395 = vpack.c.b16 %v380, %v379
    %v396 = vpack.c.b16 %v382, %v381
    %v397 = vpack.c.b16 %v384, %v383
    %v398 = vpack.c.b16 %v386, %v385
    %v399 = vpack.c.b16 %v388, %v387
    %v400 = vpack.c.b16 %v390, %v389
    %v401 = vpack.c.b16 %v392, %v391
    %v402 = vpack.c.b16 %v394, %v393
    %411 = vmatprep.subr.bf16.mxu0 0
    %412 = vmatpush1.bf16.msra.mxu0 %v395
    %413 = vmatprep.subr.bf16.mxu0 0
    %414 = vmatpush1.bf16.msra.mxu0 %v396
    %415 = vmatprep.subr.bf16.mxu0 0
    %416 = vmatpush1.bf16.msra.mxu0 %v397
    %417 = vmatprep.subr.bf16.mxu0 0
    %418 = vmatpush1.bf16.msra.mxu0 %v398
    %419 = vmatprep.subr.bf16.mxu0 0
    %420 = vmatpush1.bf16.msra.mxu0 %v399
    %421 = vmatprep.subr.bf16.mxu0 0
    %422 = vmatpush1.bf16.msra.mxu0 %v400
    %423 = vmatprep.subr.bf16.mxu0 0
    %424 = vmatpush1.bf16.msra.mxu0 %v401
    %425 = vmatprep.subr.bf16.mxu0 0
    %426 = vmatpush1.bf16.msra.mxu0 %v402
    %427 = vmatprep.subr.bf16.mxu0 0
    %428 = vmatpush1.bf16.msra.mxu0 0
    %429 = vmatprep.subr.bf16.mxu0 0
    %430 = vmatpush1.bf16.msra.mxu0 0
    %431 = vmatprep.subr.bf16.mxu0 0
    %432 = vmatpush1.bf16.msra.mxu0 0
    %433 = vmatprep.subr.bf16.mxu0 0
    %434 = vmatpush1.bf16.msra.mxu0 0
    %435 = vmatprep.subr.bf16.mxu0 0
    %436 = vmatpush1.bf16.msra.mxu0 0
    %437 = vmatprep.subr.bf16.mxu0 0
    %438 = vmatpush1.bf16.msra.mxu0 0
    %439 = vmatprep.subr.bf16.mxu0 0
    %440 = vmatpush1.bf16.msra.mxu0 0
    %441 = vmatprep.subr.bf16.mxu0 0
    %442 = vmatpush1.bf16.msra.mxu0 0
    %443 = vmatprep.mubr.bf16.mxu0 0
    %444 = vmatmul.mubr.bf16.gmra.mrb[0].mxu0 %v362
    %v445 = vpop.f32.mrb[0].mxu0
    %v446 = vadd.f32 0.0, %v445
    %v447 = vpop.f32.mrb[0].mxu0
    %v448 = vpop.f32.mrb[0].mxu0
    %v449 = vadd.f32 0.0, %v448
    %v450 = vpop.f32.mrb[0].mxu0
    %451 = vdwg.mxu0
    %v452 = vadd.f32 %v243, %v446
    %v453 = vadd.f32 %v244, %v449
    %v454 = vlaneseq
    %v455 = vshrl.u32 %v454, 7
    %v456 = vsub.s32 0, %v455
    %v457 = vrot.slane %v361, %v456
    %v458 = vadd.f32 %v452, %v457
    %v459 = vadd.f32 %v453, %v457
    %v460 = vsel %vm142, %v458, 0.0
    %461 = vadd.xlane.f32.xlu0 %v460
    %v462 = vpop.xlane.xlu0 %461
    %v463 = vsel %vm142, %v459, 0.0
    %464 = vadd.xlane.f32.xlu0 %v463
    %v465 = vpop.xlane.xlu0 %464
    %v466 = vmul.f32 %v462, %v149
    %v467 = vmul.f32 %v465, %v149
    %v468 = vmul.f32 %v458, %v458
    %v469 = vmul.f32 %v459, %v459
    %v470 = vsel %vm142, %v468, 0.0
    %471 = vadd.xlane.f32.xlu0 %v470
    %v472 = vpop.xlane.xlu0 %471
    %v473 = vsel %vm142, %v469, 0.0
    %474 = vadd.xlane.f32.xlu0 %v473
    %v475 = vpop.xlane.xlu0 %474
    %v476 = vmul.f32 %v472, %v149
    %v477 = vmul.f32 %v475, %v149
    %v478 = vsub.f32 %v458, %v466
    %v479 = vsub.f32 %v459, %v467
    %v480 = vmul.f32 %v466, %v466
    %v481 = vmul.f32 %v467, %v467
    %v482 = vsub.f32 %v476, %v480
    %v483 = vsub.f32 %v477, %v481
    %v484 = vadd.f32 %v482, 1e-05
    %v485 = vadd.f32 %v483, 1e-05
    %v486 = vrsqrt.pop %v484
    %v487 = vrsqrt.pop %v485
    %v488 = vmul.f32 %v478, %v486
    %v489 = vmul.f32 %v479, %v487
    %v490 = vld [vmem:[%s1 + $0x98] sm:$0xf]
    %v491 = vld [vmem:[%s1 + $0x9c] sm:$0xf]
    %v492 = vld [vmem:[%s1 + $0xa0] sm:$0xf]
    %v493 = vld [vmem:[%s1 + $0xa4] sm:$0xf]
    %v494 = vld [vmem:[%s2 + $0x2c] sm:$0x1]
    %v495 = vunpack.c.l.bf16 %v494
    %v496 = vpack.c.bf16 %v489, %v488
    %v501 = vunpack.c.l.b16 %v490
    %v502 = vunpack.c.l.b16 %v491
    %v503 = vunpack.c.l.b16 %v492
    %v504 = vunpack.c.l.b16 %v493
    %v505 = vpack.c.b16 %v502, %v501
    %v506 = vpack.c.b16 %v504, %v503
    %v510 = vsel %vm142, %v496, 0
    %512 = vmatprep.subr.bf16.mxu0 0
    %513 = vmatpush1.bf16.msra.mxu0 %v505
    %514 = vmatprep.subr.bf16.mxu0 0
    %515 = vmatpush1.bf16.msra.mxu0 %v506
    %516 = vmatprep.subr.bf16.mxu0 0
    %517 = vmatpush1.bf16.msra.mxu0 0
    %518 = vmatprep.subr.bf16.mxu0 0
    %519 = vmatpush1.bf16.msra.mxu0 0
    %520 = vmatprep.subr.bf16.mxu0 0
    %521 = vmatpush1.bf16.msra.mxu0 0
    %522 = vmatprep.subr.bf16.mxu0 0
    %523 = vmatpush1.bf16.msra.mxu0 0
    %524 = vmatprep.subr.bf16.mxu0 0
    %525 = vmatpush1.bf16.msra.mxu0 0
    %526 = vmatprep.subr.bf16.mxu0 0
    %527 = vmatpush1.bf16.msra.mxu0 0
    %528 = vmatprep.subr.bf16.mxu0 0
    %529 = vmatpush1.bf16.msra.mxu0 0
    %530 = vmatprep.subr.bf16.mxu0 0
    %531 = vmatpush1.bf16.msra.mxu0 0
    %532 = vmatprep.subr.bf16.mxu0 0
    %533 = vmatpush1.bf16.msra.mxu0 0
    %534 = vmatprep.subr.bf16.mxu0 0
    %535 = vmatpush1.bf16.msra.mxu0 0
    %536 = vmatprep.subr.bf16.mxu0 0
    %537 = vmatpush1.bf16.msra.mxu0 0
    %538 = vmatprep.subr.bf16.mxu0 0
    %539 = vmatpush1.bf16.msra.mxu0 0
    %540 = vmatprep.subr.bf16.mxu0 0
    %541 = vmatpush1.bf16.msra.mxu0 0
    %542 = vmatprep.subr.bf16.mxu0 0
    %543 = vmatpush1.bf16.msra.mxu0 0
    %544 = vmatprep.mubr.bf16.mxu0 0
    %545 = vmatmul.mubr.bf16.gmra.mrb[0].mxu0 %v510
    %v546 = vpop.f32.mrb[0].mxu0
    %v547 = vadd.f32 0.0, %v546
    %v548 = vpop.f32.mrb[0].mxu0
    %v549 = vpop.f32.mrb[0].mxu0
    %v550 = vadd.f32 0.0, %v549
    %v551 = vpop.f32.mrb[0].mxu0
    %552 = vdwg.mxu0
    %v553 = vadd.f32 %v458, %v547
    %v554 = vadd.f32 %v459, %v550
    %v555 = vlaneseq
    %v556 = vshrl.u32 %v555, 7
    %v557 = vsub.s32 0, %v556
    %v558 = vrot.slane %v495, %v557
    %v559 = vadd.f32 %v553, %v558
    %v560 = vadd.f32 %v554, %v558
    %v561 = vsel %vm142, %v559, 0.0
    %562 = vadd.xlane.f32.xlu0 %v561
    %v563 = vpop.xlane.xlu0 %562
    %v564 = vsel %vm142, %v560, 0.0
    %565 = vadd.xlane.f32.xlu0 %v564
    %v566 = vpop.xlane.xlu0 %565
    %v567 = vmul.f32 %v563, %v149
    %v568 = vmul.f32 %v566, %v149
    %v569 = vmul.f32 %v559, %v559
    %v570 = vmul.f32 %v560, %v560
    %v571 = vsel %vm142, %v569, 0.0
    %572 = vadd.xlane.f32.xlu0 %v571
    %v573 = vpop.xlane.xlu0 %572
    %v574 = vsel %vm142, %v570, 0.0
    %575 = vadd.xlane.f32.xlu0 %v574
    %v576 = vpop.xlane.xlu0 %575
    %v577 = vmul.f32 %v573, %v149
    %v578 = vmul.f32 %v576, %v149
    %v579 = vsub.f32 %v559, %v567
    %v580 = vsub.f32 %v560, %v568
    %v581 = vmul.f32 %v567, %v567
    %v582 = vmul.f32 %v568, %v568
    %v583 = vsub.f32 %v577, %v581
    %v584 = vsub.f32 %v578, %v582
    %v585 = vadd.f32 %v583, 1e-05
    %v586 = vadd.f32 %v584, 1e-05
    %v587 = vrsqrt.pop %v585
    %v588 = vrsqrt.pop %v586
    %v589 = vmul.f32 %v579, %v587
    %v590 = vmul.f32 %v580, %v588
    %v591 = vld [vmem:[%s2 + $0x1c] sm:$0xf]
    %v592 = vld [vmem:[%s2 + $0x20] sm:$0xf]
    %v593 = vld [vmem:[%s2 + $0x24] sm:$0xf]
    %v594 = vld [vmem:[%s2 + $0x28] sm:$0xf]
    %v595 = vld [vmem:[%s2 + $0x30] sm:$0x1]
    %v596 = vunpack.c.l.bf16 %v595
    %v597 = vpack.c.bf16 %v590, %v589
    %v598 = vlaneseq
    %v599 = vshrl.u32 %v598, 7
    %v600 = vsub.s32 0, %v599
    %v601 = vrot.slane %v596, %v600
    %v606 = vunpack.c.l.b16 %v591
    %v607 = vunpack.c.l.b16 %v592
    %v608 = vunpack.c.l.b16 %v593
    %v609 = vunpack.c.l.b16 %v594
    %v610 = vpack.c.b16 %v607, %v606
    %v611 = vpack.c.b16 %v609, %v608
    %v615 = vsel %vm142, %v597, 0
    %617 = vmatprep.subr.bf16.mxu0 0
    %618 = vmatpush1.bf16.msra.mxu0 %v610
    %619 = vmatprep.subr.bf16.mxu0 0
    %620 = vmatpush1.bf16.msra.mxu0 %v611
    %621 = vmatprep.subr.bf16.mxu0 0
    %622 = vmatpush1.bf16.msra.mxu0 0
    %623 = vmatprep.subr.bf16.mxu0 0
    %624 = vmatpush1.bf16.msra.mxu0 0
    %625 = vmatprep.subr.bf16.mxu0 0
    %626 = vmatpush1.bf16.msra.mxu0 0
    %627 = vmatprep.subr.bf16.mxu0 0
    %628 = vmatpush1.bf16.msra.mxu0 0
    %629 = vmatprep.subr.bf16.mxu0 0
    %630 = vmatpush1.bf16.msra.mxu0 0
    %631 = vmatprep.subr.bf16.mxu0 0
    %632 = vmatpush1.bf16.msra.mxu0 0
    %633 = vmatprep.subr.bf16.mxu0 0
    %634 = vmatpush1.bf16.msra.mxu0 0
    %635 = vmatprep.subr.bf16.mxu0 0
    %636 = vmatpush1.bf16.msra.mxu0 0
    %637 = vmatprep.subr.bf16.mxu0 0
    %638 = vmatpush1.bf16.msra.mxu0 0
    %639 = vmatprep.subr.bf16.mxu0 0
    %640 = vmatpush1.bf16.msra.mxu0 0
    %641 = vmatprep.subr.bf16.mxu0 0
    %642 = vmatpush1.bf16.msra.mxu0 0
    %643 = vmatprep.subr.bf16.mxu0 0
    %644 = vmatpush1.bf16.msra.mxu0 0
    %645 = vmatprep.subr.bf16.mxu0 0
    %646 = vmatpush1.bf16.msra.mxu0 0
    %647 = vmatprep.subr.bf16.mxu0 0
    %648 = vmatpush1.bf16.msra.mxu0 0
    %649 = vmatprep.mubr.bf16.mxu0 0
    %650 = vmatmul.mubr.bf16.gmra.mrb[0].mxu0 %v615
    %v651 = vpop.f32.mrb[0].mxu0
    %v652 = vadd.f32 %v601, %v651
    %v653 = vpop.f32.mrb[0].mxu0
    %v654 = vpop.f32.mrb[0].mxu0
    %v655 = vadd.f32 %v601, %v654
    %v656 = vpop.f32.mrb[0].mxu0
    %657 = vdwg.mxu0
    %v658 = vmax.f32 %v652, 0.0
    %v659 = vmax.f32 %v655, 0.0
    %v660 = vld [vmem:[%s1 + $0xa8] sm:$0xf]
    %v661 = vld [vmem:[%s1 + $0xac] sm:$0xf]
    %v662 = vld [vmem:[%s1 + $0xb0] sm:$0xf]
    %v663 = vld [vmem:[%s1 + $0xb4] sm:$0xf]
    %v664 = vld [vmem:[%s1 + $0xb8] sm:$0xf]
    %v665 = vld [vmem:[%s1 + $0xbc] sm:$0xf]
    %v666 = vld [vmem:[%s1 + $0xc0] sm:$0xf]
    %v667 = vld [vmem:[%s1 + $0xc4] sm:$0xf]
    %v668 = vld [vmem:[%s1 + $0xc8] sm:$0xf]
    %v669 = vld [vmem:[%s1 + $0xcc] sm:$0xf]
    %v670 = vld [vmem:[%s1 + $0xd0] sm:$0xf]
    %v671 = vld [vmem:[%s1 + $0xd4] sm:$0xf]
    %v672 = vld [vmem:[%s1 + $0xd8] sm:$0xf]
    %v673 = vld [vmem:[%s1 + $0xdc] sm:$0xf]
    %v674 = vld [vmem:[%s1 + $0xe0] sm:$0xf]
    %v675 = vld [vmem:[%s1 + $0xe4] sm:$0xf]
    %v676 = vld [vmem:[%s2 + $0x34] sm:$0x1]
    %v677 = vunpack.c.l.bf16 %v676
    %v678 = vpack.c.bf16 %v659, %v658
    %v695 = vunpack.c.l.b16 %v660
    %v696 = vunpack.c.l.b16 %v661
    %v697 = vunpack.c.l.b16 %v662
    %v698 = vunpack.c.l.b16 %v663
    %v699 = vunpack.c.l.b16 %v664
    %v700 = vunpack.c.l.b16 %v665
    %v701 = vunpack.c.l.b16 %v666
    %v702 = vunpack.c.l.b16 %v667
    %v703 = vunpack.c.l.b16 %v668
    %v704 = vunpack.c.l.b16 %v669
    %v705 = vunpack.c.l.b16 %v670
    %v706 = vunpack.c.l.b16 %v671
    %v707 = vunpack.c.l.b16 %v672
    %v708 = vunpack.c.l.b16 %v673
    %v709 = vunpack.c.l.b16 %v674
    %v710 = vunpack.c.l.b16 %v675
    %v711 = vpack.c.b16 %v696, %v695
    %v712 = vpack.c.b16 %v698, %v697
    %v713 = vpack.c.b16 %v700, %v699
    %v714 = vpack.c.b16 %v702, %v701
    %v715 = vpack.c.b16 %v704, %v703
    %v716 = vpack.c.b16 %v706, %v705
    %v717 = vpack.c.b16 %v708, %v707
    %v718 = vpack.c.b16 %v710, %v709
    %727 = vmatprep.subr.bf16.mxu0 0
    %728 = vmatpush1.bf16.msra.mxu0 %v711
    %729 = vmatprep.subr.bf16.mxu0 0
    %730 = vmatpush1.bf16.msra.mxu0 %v712
    %731 = vmatprep.subr.bf16.mxu0 0
    %732 = vmatpush1.bf16.msra.mxu0 %v713
    %733 = vmatprep.subr.bf16.mxu0 0
    %734 = vmatpush1.bf16.msra.mxu0 %v714
    %735 = vmatprep.subr.bf16.mxu0 0
    %736 = vmatpush1.bf16.msra.mxu0 %v715
    %737 = vmatprep.subr.bf16.mxu0 0
    %738 = vmatpush1.bf16.msra.mxu0 %v716
    %739 = vmatprep.subr.bf16.mxu0 0
    %740 = vmatpush1.bf16.msra.mxu0 %v717
    %741 = vmatprep.subr.bf16.mxu0 0
    %742 = vmatpush1.bf16.msra.mxu0 %v718
    %743 = vmatprep.subr.bf16.mxu0 0
    %744 = vmatpush1.bf16.msra.mxu0 0
    %745 = vmatprep.subr.bf16.mxu0 0
    %746 = vmatpush1.bf16.msra.mxu0 0
    %747 = vmatprep.subr.bf16.mxu0 0
    %748 = vmatpush1.bf16.msra.mxu0 0
    %749 = vmatprep.subr.bf16.mxu0 0
    %750 = vmatpush1.bf16.msra.mxu0 0
    %751 = vmatprep.subr.bf16.mxu0 0
    %752 = vmatpush1.bf16.msra.mxu0 0
    %753 = vmatprep.subr.bf16.mxu0 0
    %754 = vmatpush1.bf16.msra.mxu0 0
    %755 = vmatprep.subr.bf16.mxu0 0
    %756 = vmatpush1.bf16.msra.mxu0 0
    %757 = vmatprep.subr.bf16.mxu0 0
    %758 = vmatpush1.bf16.msra.mxu0 0
    %759 = vmatprep.mubr.bf16.mxu0 0
    %760 = vmatmul.mubr.bf16.gmra.mrb[0].mxu0 %v678
    %v761 = vpop.f32.mrb[0].mxu0
    %v762 = vadd.f32 0.0, %v761
    %v763 = vpop.f32.mrb[0].mxu0
    %v764 = vpop.f32.mrb[0].mxu0
    %v765 = vadd.f32 0.0, %v764
    %v766 = vpop.f32.mrb[0].mxu0
    %767 = vdwg.mxu0
    %v768 = vadd.f32 %v559, %v762
    %v769 = vadd.f32 %v560, %v765
    %v770 = vlaneseq
    %v771 = vshrl.u32 %v770, 7
    %v772 = vsub.s32 0, %v771
    %v773 = vrot.slane %v677, %v772
    %v774 = vadd.f32 %v768, %v773
    %v775 = vadd.f32 %v769, %v773
    %v776 = vsel %vm142, %v774, 0.0
    %777 = vadd.xlane.f32.xlu0 %v776
    %v778 = vpop.xlane.xlu0 %777
    %v779 = vsel %vm142, %v775, 0.0
    %780 = vadd.xlane.f32.xlu0 %v779
    %v781 = vpop.xlane.xlu0 %780
    %v782 = vmul.f32 %v778, %v149
    %v783 = vmul.f32 %v781, %v149
    %v784 = vmul.f32 %v774, %v774
    %v785 = vmul.f32 %v775, %v775
    %v786 = vsel %vm142, %v784, 0.0
    %787 = vadd.xlane.f32.xlu0 %v786
    %v788 = vpop.xlane.xlu0 %787
    %v789 = vsel %vm142, %v785, 0.0
    %790 = vadd.xlane.f32.xlu0 %v789
    %v791 = vpop.xlane.xlu0 %790
    %v792 = vmul.f32 %v788, %v149
    %v793 = vmul.f32 %v791, %v149
    %v794 = vsub.f32 %v774, %v782
    %v795 = vsub.f32 %v775, %v783
    %v796 = vmul.f32 %v782, %v782
    %v797 = vmul.f32 %v783, %v783
    %v798 = vsub.f32 %v792, %v796
    %v799 = vsub.f32 %v793, %v797
    %v800 = vadd.f32 %v798, 1e-05
    %v801 = vadd.f32 %v799, 1e-05
    %v802 = vrsqrt.pop %v800
    %v803 = vrsqrt.pop %v801
    %v804 = vmul.f32 %v794, %v802
    %v805 = vmul.f32 %v795, %v803
    %v806 = vld [vmem:[%s2 + $0x38] sm:$0xf]
    %v807 = vld [vmem:[%s2 + $0x3c] sm:$0xf]
    %v808 = vld [vmem:[%s2 + $0x40] sm:$0xf]
    %v809 = vld [vmem:[%s2 + $0x44] sm:$0xf]
    %v810 = vld [vmem:[%s2 + $0x48] sm:$0x1]
    %v811 = vunpack.c.l.bf16 %v810
    %v812 = vpack.c.bf16 %v805, %v804
    %v813 = vlaneseq
    %v814 = vshrl.u32 %v813, 7
    %v815 = vsub.s32 0, %v814
    %v816 = vrot.slane %v811, %v815
    %v821 = vunpack.c.l.b16 %v806
    %v822 = vunpack.c.l.b16 %v807
    %v823 = vunpack.c.l.b16 %v808
    %v824 = vunpack.c.l.b16 %v809
    %v825 = vpack.c.b16 %v822, %v821
    %v826 = vpack.c.b16 %v824, %v823
    %v830 = vsel %vm142, %v812, 0
    %832 = vmatprep.subr.bf16.mxu0 0
    %833 = vmatpush1.bf16.msra.mxu0 %v825
    %834 = vmatprep.subr.bf16.mxu0 0
    %835 = vmatpush1.bf16.msra.mxu0 %v826
    %836 = vmatprep.subr.bf16.mxu0 0
    %837 = vmatpush1.bf16.msra.mxu0 0
    %838 = vmatprep.subr.bf16.mxu0 0
    %839 = vmatpush1.bf16.msra.mxu0 0
    %840 = vmatprep.subr.bf16.mxu0 0
    %841 = vmatpush1.bf16.msra.mxu0 0
    %842 = vmatprep.subr.bf16.mxu0 0
    %843 = vmatpush1.bf16.msra.mxu0 0
    %844 = vmatprep.subr.bf16.mxu0 0
    %845 = vmatpush1.bf16.msra.mxu0 0
    %846 = vmatprep.subr.bf16.mxu0 0
    %847 = vmatpush1.bf16.msra.mxu0 0
    %848 = vmatprep.subr.bf16.mxu0 0
    %849 = vmatpush1.bf16.msra.mxu0 0
    %850 = vmatprep.subr.bf16.mxu0 0
    %851 = vmatpush1.bf16.msra.mxu0 0
    %852 = vmatprep.subr.bf16.mxu0 0
    %853 = vmatpush1.bf16.msra.mxu0 0
    %854 = vmatprep.subr.bf16.mxu0 0
    %855 = vmatpush1.bf16.msra.mxu0 0
    %856 = vmatprep.subr.bf16.mxu0 0
    %857 = vmatpush1.bf16.msra.mxu0 0
    %858 = vmatprep.subr.bf16.mxu0 0
    %859 = vmatpush1.bf16.msra.mxu0 0
    %860 = vmatprep.subr.bf16.mxu0 0
    %861 = vmatpush1.bf16.msra.mxu0 0
    %862 = vmatprep.subr.bf16.mxu0 0
    %863 = vmatpush1.bf16.msra.mxu0 0
    %864 = vmatprep.mubr.bf16.mxu0 0
    %865 = vmatmul.mubr.bf16.gmra.mrb[0].mxu0 %v830
    %v866 = vpop.f32.mrb[0].mxu0
    %v867 = vadd.f32 %v816, %v866
    %v868 = vpop.f32.mrb[0].mxu0
    %v869 = vpop.f32.mrb[0].mxu0
    %v870 = vadd.f32 %v816, %v869
    %v871 = vpop.f32.mrb[0].mxu0
    %872 = vdwg.mxu0
    %873 = vst [vmem:[#allocation2] sm:$0xff] %v867
    %874 = vst [vmem:[#allocation2 + $0x8] sm:$0xff] %v870
    // Predicated region
    $region14: #{tpu_custom_call.1} parent=1 // pred_check
      _
    $region15: #{tpu_custom_call.1} parent=1 // pred_check_branch
      %876 = sbr.rel (0) target = $region17
    $region16: #{tpu_custom_call.1} parent=1 // pred_region
      %s878 = ssub.s32 256, 256
      %879 = vsyncadd [#allocation3], %s878
      %s880 = sshll.u32 [#allocation2], 4
      %s881 = int_to_ptr.vmem [resolvable:$true] %s880
      %886 = dma.vmem_to_hbm [thread:$0]  %s881, 256, %s3, [#allocation3], 128, 128, 8
    $region17: #{tpu_custom_call.1} parent=1 // pred_fallthru
      _
    // Predicated region
    $region18: #{tpu_custom_call.1} parent=1 // pred_check
      _
    $region19: #{tpu_custom_call.1} parent=1 // pred_check_branch
      %888 = sbr.rel (0) target = $region21
    $region20: #{tpu_custom_call.1} parent=1 // pred_region
      %889 = dma.done [#allocation3], 256
    $region21: #{tpu_custom_call.1} parent=1 // pred_fallthru
      _
    %890 = vsyncpa [#allocation3], 1

</llo_original>
